<compile_context>
chip_gen: v7x
topology: tpu7x:2x2x1
jax: 0.10.0
libtpu: 0.0.40
codegen_flags: <defaults>
</compile_context>

<pallas_src>
import math
import functools

import jax
import jax.numpy as jnp
from jax import lax
from jax.experimental import pallas as pl
from jax.experimental.pallas import tpu as pltpu

_RATIO = 0.8
_SCALE1 = 1.0 - _RATIO            # mean-path scale
_SCALE2 = 1.0 + _RATIO ** 2       # std-path scale (applied before sqrt)

# Contract x:[tm, tk] with w:[tn, tk] on the K axis -> [tm, tn], no transpose
# (W stays in its native (out_features, in_features) layout; no XLU work).
_DN = (((1,), (1,)), ((), ()))


def _mnn_linear_kernel(x1_ref, x2_ref, w_ref, o1_ref, o2_ref):
    k = pl.program_id(2)

    @pl.when(k == 0)
    def _init():
        o1_ref[...] = jnp.zeros_like(o1_ref)
        o2_ref[...] = jnp.zeros_like(o2_ref)

    x1 = x1_ref[...]                                   # bf16 (tm, tk)
    w = w_ref[...]                                     # bf16 (tn, tk)

    # Std-path operands: square in f32 on the VPU, then cast to bf16 for the
    # MXU (v5e-friendly; keeps the precision loss confined to the input cast).
    x2f = x2_ref[...].astype(jnp.float32)
    x2sq = (x2f * x2f).astype(jnp.bfloat16)
    wf = w.astype(jnp.float32)
    w2 = (wf * wf).astype(jnp.bfloat16)

    # Mean path: x1 @ W.T   (f32 accumulation into the resident output block)
    o1_ref[...] += lax.dot_general(
        x1, w, dimension_numbers=_DN, preferred_element_type=jnp.float32)

    # Std path: (x2^2) @ (W^2).T
    o2_ref[...] += lax.dot_general(
        x2sq, w2, dimension_numbers=_DN, preferred_element_type=jnp.float32)

    @pl.when(k == pl.num_programs(2) - 1)
    def _finalize():
        o1_ref[...] = o1_ref[...] * _SCALE1
        o2_ref[...] = jnp.sqrt(o2_ref[...] * _SCALE2)


def _round_up(a: int, b: int) -> int:
    return -(-a // b) * b


def _tile_and_pad(extent: int, preferred: int, align: int):
    """Minimally pad `extent` to `align`, then pick an aligned tile <= preferred
    that divides the (possibly slightly re-padded) extent.  Returns (tile, padded)."""
    preferred = _round_up(preferred, align)
    ext = _round_up(extent, align)
    n_steps = -(-ext // min(preferred, ext))           # ceil-div
    tile = _round_up(-(-ext // n_steps), align)
    return tile, n_steps * tile


def _pad2(x, rows: int, cols: int):
    pr, pc = rows - x.shape[0], cols - x.shape[1]
    if pr == 0 and pc == 0:
        return x
    return jnp.pad(x, ((0, pr), (0, pc)))


@functools.partial(jax.jit, static_argnames=("tm", "tn", "tk"))
def mnn_linear(x1, x2, weight, *, tm: int = 512, tn: int = 512, tk: int = 1024):
    """Pallas implementation of Mnn_Linear.forward (bias=False)."""
    batch, in_features = x1.shape
    out_features, in_w = weight.shape
    assert x2.shape == (batch, in_features)
    assert in_w == in_features

    # Minimal padding + aligned tiles (M -> 16 for bf16 sublane packing,
    # N / K -> 128 lane alignment).
    tm_eff, m_pad = _tile_and_pad(batch, tm, 16)
    tn_eff, n_pad = _tile_and_pad(out_features, tn, 128)
    tk_eff, k_pad = _tile_and_pad(in_features, tk, 128)

    # Keep both v7x TensorCores busy: ensure >= 2 blocks on the parallel axes
    # when the (aligned) problem allows a clean split.
    if (m_pad // tm_eff) * (n_pad // tn_eff) < 2:
        if n_pad % 256 == 0:
            tn_eff = n_pad // 2
        elif m_pad % 32 == 0:
            tm_eff = m_pad // 2

    # bf16 MXU operands; padding fuses with the cast and is skipped when the
    # shape is already aligned.  (Weight prep could be hoisted by the caller.)
    x1p = _pad2(x1.astype(jnp.bfloat16), m_pad, k_pad)
    x2p = _pad2(x2.astype(jnp.bfloat16), m_pad, k_pad)
    wp = _pad2(weight.astype(jnp.bfloat16), n_pad, k_pad)

    grid = (m_pad // tm_eff, n_pad // tn_eff, k_pad // tk_eff)

    cost = pl.CostEstimate(
        flops=4 * m_pad * n_pad * k_pad,                       # two matmuls
        transcendentals=m_pad * n_pad,                         # sqrt
        bytes_accessed=2 * (2 * m_pad * k_pad + n_pad * k_pad)  # bf16 inputs
        + 4 * 2 * m_pad * n_pad,                               # f32 outputs
    )

    out1p, out2p = pl.pallas_call(
        _mnn_linear_kernel,
        out_shape=(
            jax.ShapeDtypeStruct((m_pad, n_pad), jnp.float32),
            jax.ShapeDtypeStruct((m_pad, n_pad), jnp.float32),
        ),
        grid_spec=pltpu.PrefetchScalarGridSpec(
            num_scalar_prefetch=0,
            grid=grid,
            in_specs=[
                pl.BlockSpec((tm_eff, tk_eff), lambda i, j, k: (i, k)),  # x1
                pl.BlockSpec((tm_eff, tk_eff), lambda i, j, k: (i, k)),  # x2
                pl.BlockSpec((tn_eff, tk_eff), lambda i, j, k: (j, k)),  # W
            ],
            out_specs=[
                pl.BlockSpec((tm_eff, tn_eff), lambda i, j, k: (i, j)),  # out1
                pl.BlockSpec((tm_eff, tn_eff), lambda i, j, k: (i, j)),  # out2
            ],
        ),
        compiler_params=pltpu.CompilerParams(
            dimension_semantics=("parallel", "parallel", "arbitrary"),
            vmem_limit_bytes=48 * 1024 * 1024,
        ),
        cost_estimate=cost,
    )(x1p, x2p, wp)

    return out1p[:batch, :out_features], out2p[:batch, :out_features]


def init_weight(key, out_features, in_features):
    # kaiming_uniform_(a=sqrt(5)) => uniform(-b, b) with b = 1/sqrt(fan_in)
    bound = 1.0 / math.sqrt(in_features)
    return jax.random.uniform(
        key, (out_features, in_features), jnp.float32,
        minval=-bound, maxval=bound)


if __name__ == "__main__":
    key = jax.random.PRNGKey(0)
    k_w, k_x1, k_x2 = jax.random.split(key, 3)

    batch, in_features, out_features = 8, 32, 32
    weight = init_weight(k_w, out_features, in_features)
    x1 = jax.random.normal(k_x1, (batch, in_features), jnp.float32)
    # std-path input (it gets squared, so sign is irrelevant)
    x2 = jax.random.uniform(k_x2, (batch, in_features), jnp.float32,
                            minval=0.1, maxval=1.0)

    out1, out2 = mnn_linear(x1, x2, weight)
    jax.block_until_ready((out1, out2))

    # Reference check in plain JAX (f32).  Tolerance relaxed because the
    # kernel feeds the MXU bf16 operands (f32 accumulation).
    ref1 = (x1 @ weight.T) * _SCALE1
    ref2 = jnp.sqrt(((x2 ** 2) @ (weight ** 2).T) * _SCALE2)
    assert out1.shape == (batch, out_features)
    assert out2.shape == (batch, out_features)
    assert jnp.allclose(out1, ref1, rtol=3e-2, atol=3e-3), (
        float(jnp.max(jnp.abs(out1 - ref1))))
    assert jnp.allclose(out2, ref2, rtol=3e-2, atol=3e-3), (
        float(jnp.max(jnp.abs(out2 - ref2))))

    print("KERNEL_OK")
</pallas_src>

<mosaic_0001>
module attributes {stable_mosaic.version = 11 : i64} {
  func.func @_mnn_linear_kernel(%arg0: i32, %arg1: i32, %arg2: i32, %arg3: memref<16x128xbf16, #tpu.memory_space<vmem>>, %arg4: memref<16x128xbf16, #tpu.memory_space<vmem>>, %arg5: memref<128x128xbf16, #tpu.memory_space<vmem>>, %arg6: memref<16x128xf32, #tpu.memory_space<vmem>>, %arg7: memref<16x128xf32, #tpu.memory_space<vmem>>) attributes {dimension_semantics = [#tpu.dimension_semantics<parallel>, #tpu.dimension_semantics<parallel>, #tpu.dimension_semantics<arbitrary>], iteration_bounds = array<i64: 1, 1, 1>, scalar_prefetch = 0 : i64, scratch_operands = 0 : i64, tpu.core_type = #tpu.core_type<tc>, window_params = [{transform_indices = @transform_0, window_bounds = array<i64: 16, 128>}, {transform_indices = @transform_1, window_bounds = array<i64: 16, 128>}, {transform_indices = @transform_2, window_bounds = array<i64: 128, 128>}, {transform_indices = @transform_3, window_bounds = array<i64: 16, 128>}, {transform_indices = @transform_4, window_bounds = array<i64: 16, 128>}]} {
    %c0_i32 = arith.constant 0 : i32
    %0 = arith.cmpi eq, %arg2, %c0_i32 : i32
    %1 = arith.extui %0 : i1 to i32
    %c0_i32_0 = arith.constant 0 : i32
    %2 = arith.cmpi ne, %1, %c0_i32_0 : i32
    scf.if %2 {
      %cst_17 = arith.constant 0.000000e+00 : f32
      %23 = vector.broadcast %cst_17 : f32 to vector<16x128xf32>
      %c0_18 = arith.constant 0 : index
      %c0_19 = arith.constant 0 : index
      %24 = vector.load %arg6[%c0_18, %c0_19] : memref<16x128xf32, #tpu.memory_space<vmem>>, vector<16x128xf32>
      tpu.vector_store %arg6[%c0_18, %c0_19], %23 {strides = array<i32>} : memref<16x128xf32, #tpu.memory_space<vmem>>, vector<16x128xf32>,
      %cst_20 = arith.constant 0.000000e+00 : f32
      %25 = vector.broadcast %cst_20 : f32 to vector<16x128xf32>
      %c0_21 = arith.constant 0 : index
      %c0_22 = arith.constant 0 : index
      %26 = vector.load %arg7[%c0_21, %c0_22] : memref<16x128xf32, #tpu.memory_space<vmem>>, vector<16x128xf32>
      tpu.vector_store %arg7[%c0_21, %c0_22], %25 {strides = array<i32>} : memref<16x128xf32, #tpu.memory_space<vmem>>, vector<16x128xf32>,
    } else {
    }
    %c0 = arith.constant 0 : index
    %c0_1 = arith.constant 0 : index
    %3 = vector.load %arg3[%c0, %c0_1] : memref<16x128xbf16, #tpu.memory_space<vmem>>, vector<16x128xbf16>
    %c0_2 = arith.constant 0 : index
    %c0_3 = arith.constant 0 : index
    %4 = vector.load %arg5[%c0_2, %c0_3] : memref<128x128xbf16, #tpu.memory_space<vmem>>, vector<128x128xbf16>
    %c0_4 = arith.constant 0 : index
    %c0_5 = arith.constant 0 : index
    %5 = vector.load %arg4[%c0_4, %c0_5] : memref<16x128xbf16, #tpu.memory_space<vmem>>, vector<16x128xbf16>
    %6 = arith.extf %5 : vector<16x128xbf16> to vector<16x128xf32>
    %7 = arith.mulf %6, %6 : vector<16x128xf32>
    %8 = arith.truncf %7 : vector<16x128xf32> to vector<16x128xbf16>
    %9 = arith.extf %4 : vector<128x128xbf16> to vector<128x128xf32>
    %10 = arith.mulf %9, %9 : vector<128x128xf32>
    %11 = arith.truncf %10 : vector<128x128xf32> to vector<128x128xbf16>
    %c0_6 = arith.constant 0 : index
    %c0_7 = arith.constant 0 : index
    %12 = vector.load %arg6[%c0_6, %c0_7] : memref<16x128xf32, #tpu.memory_space<vmem>>, vector<16x128xf32>
    %cst = arith.constant dense<0.000000e+00> : vector<16x128xf32>
    %13 = tpu.matmul %3, %4, %cst {dimension_numbers = #tpu.dot_dimension_numbers<[1], [1], [0], [0], [0, 0, 1, 0], [], []>} : vector<16x128xbf16>, vector<128x128xbf16>, vector<16x128xf32> -> vector<16x128xf32>
    %14 = arith.addf %12, %13 : vector<16x128xf32>
    %c0_8 = arith.constant 0 : index
    %c0_9 = arith.constant 0 : index
    %15 = vector.load %arg6[%c0_8, %c0_9] : memref<16x128xf32, #tpu.memory_space<vmem>>, vector<16x128xf32>
    tpu.vector_store %arg6[%c0_8, %c0_9], %14 {strides = array<i32>} : memref<16x128xf32, #tpu.memory_space<vmem>>, vector<16x128xf32>,
    %c0_10 = arith.constant 0 : index
    %c0_11 = arith.constant 0 : index
    %16 = vector.load %arg7[%c0_10, %c0_11] : memref<16x128xf32, #tpu.memory_space<vmem>>, vector<16x128xf32>
    %cst_12 = arith.constant dense<0.000000e+00> : vector<16x128xf32>
    %17 = tpu.matmul %8, %11, %cst_12 {dimension_numbers = #tpu.dot_dimension_numbers<[1], [1], [0], [0], [0, 0, 1, 0], [], []>} : vector<16x128xbf16>, vector<128x128xbf16>, vector<16x128xf32> -> vector<16x128xf32>
    %18 = arith.addf %16, %17 : vector<16x128xf32>
    %c0_13 = arith.constant 0 : index
    %c0_14 = arith.constant 0 : index
    %19 = vector.load %arg7[%c0_13, %c0_14] : memref<16x128xf32, #tpu.memory_space<vmem>>, vector<16x128xf32>
    tpu.vector_store %arg7[%c0_13, %c0_14], %18 {strides = array<i32>} : memref<16x128xf32, #tpu.memory_space<vmem>>, vector<16x128xf32>,
    %c0_i32_15 = arith.constant 0 : i32
    %20 = arith.cmpi eq, %arg2, %c0_i32_15 : i32
    %21 = arith.extui %20 : i1 to i32
    %c0_i32_16 = arith.constant 0 : i32
    %22 = arith.cmpi ne, %21, %c0_i32_16 : i32
    scf.if %22 {
      %c0_17 = arith.constant 0 : index
      %c0_18 = arith.constant 0 : index
      %23 = vector.load %arg6[%c0_17, %c0_18] : memref<16x128xf32, #tpu.memory_space<vmem>>, vector<16x128xf32>
      %cst_19 = arith.constant 2.000000e-01 : f32
      %24 = vector.broadcast %cst_19 : f32 to vector<16x128xf32>
      %25 = arith.mulf %23, %24 : vector<16x128xf32>
      %c0_20 = arith.constant 0 : index
      %c0_21 = arith.constant 0 : index
      %26 = vector.load %arg6[%c0_20, %c0_21] : memref<16x128xf32, #tpu.memory_space<vmem>>, vector<16x128xf32>
      tpu.vector_store %arg6[%c0_20, %c0_21], %25 {strides = array<i32>} : memref<16x128xf32, #tpu.memory_space<vmem>>, vector<16x128xf32>,
      %c0_22 = arith.constant 0 : index
      %c0_23 = arith.constant 0 : index
      %27 = vector.load %arg7[%c0_22, %c0_23] : memref<16x128xf32, #tpu.memory_space<vmem>>, vector<16x128xf32>
      %cst_24 = arith.constant 1.640000e+00 : f32
      %28 = vector.broadcast %cst_24 : f32 to vector<16x128xf32>
      %29 = arith.mulf %27, %28 : vector<16x128xf32>
      %30 = math.sqrt %29 : vector<16x128xf32>
      %c0_25 = arith.constant 0 : index
      %c0_26 = arith.constant 0 : index
      %31 = vector.load %arg7[%c0_25, %c0_26] : memref<16x128xf32, #tpu.memory_space<vmem>>, vector<16x128xf32>
      tpu.vector_store %arg7[%c0_25, %c0_26], %30 {strides = array<i32>} : memref<16x128xf32, #tpu.memory_space<vmem>>, vector<16x128xf32>,
    } else {
    }
    return
  }
  func.func @transform_0(%arg0: i32, %arg1: i32, %arg2: i32) -> (i32, i32) {
    %c0_i32 = arith.constant 0 : i32
    return %arg0, %arg2 : i32, i32
  }
  func.func @transform_1(%arg0: i32, %arg1: i32, %arg2: i32) -> (i32, i32) {
    %c0_i32 = arith.constant 0 : i32
    return %arg0, %arg2 : i32, i32
  }
  func.func @transform_2(%arg0: i32, %arg1: i32, %arg2: i32) -> (i32, i32) {
    %c0_i32 = arith.constant 0 : i32
    return %arg1, %arg2 : i32, i32
  }
  func.func @transform_3(%arg0: i32, %arg1: i32, %arg2: i32) -> (i32, i32) {
    %c0_i32 = arith.constant 0 : i32
    return %arg0, %arg1 : i32, i32
  }
  func.func @transform_4(%arg0: i32, %arg1: i32, %arg2: i32) -> (i32, i32) {
    %c0_i32 = arith.constant 0 : i32
    return %arg0, %arg1 : i32, i32
  }
}

</mosaic_0001>

<llo_original>
// kernel: mnn_linear.1
$region0: #{mnn_linear.1}
  #allocation0 [shape = 'u32[]', space=smem, size = 0x4, offset = 0x4, fixed_abs, tag = 'smem constant byte address 0x4 - core index']
  #allocation1 [shape = 'u32[144,128]{1,0:T(1,128)}', space=vmem, size = 0x12000, scoped, tag = 'internal scratch']
  %s0 = inlined_call_operand.vmem [shape: bf16[16,128], index: 0, kind: input, shape index: {}]
  %s1 = inlined_call_operand.vmem [shape: bf16[16,128], index: 1, kind: input, shape index: {}]
  %s2 = inlined_call_operand.vmem [shape: bf16[128,128], index: 2, kind: input, shape index: {}]
  %s3 = inlined_call_operand.vmem [shape: f32[16,128], index: 3, kind: output, shape index: {0}]
  %s4 = inlined_call_operand.vmem [shape: f32[16,128], index: 4, kind: output, shape index: {1}]
  %5 = xla_tuple %s3, %s4
  %s6 = sld [smem:[#allocation0]]
  $region38: #{mnn_linear.1} parent=0
    _
  %s8 = ssub.s32 1, %s6
  %s9 = scalar_select 0, %s8, %s6
  // Predicated region
  $region2: #{mnn_linear.1} parent=0 // pred_check
    _
  $region3: #{mnn_linear.1} parent=0 // pred_check_branch
    %11 = sbr.rel (0) target = $region5
  $region4: #{mnn_linear.1} parent=0 // pred_region
    _
  $region5: #{mnn_linear.1} parent=0 // pred_fallthru
    _
  // Predicated region
  $region6: #{mnn_linear.1} parent=0 // pred_check
    _
  $region7: #{mnn_linear.1} parent=0 // pred_check_branch
    %13 = sbr.rel (0) target = $region9
  $region8: #{mnn_linear.1} parent=0 // pred_region
    _
  $region9: #{mnn_linear.1} parent=0 // pred_fallthru
    _
  // Predicated region
  $region10: #{mnn_linear.1} parent=0 // pred_check
    _
  $region11: #{mnn_linear.1} parent=0 // pred_check_branch
    %15 = sbr.rel (0) target = $region13
  $region12: #{mnn_linear.1} parent=0 // pred_region
    _
  $region13: #{mnn_linear.1} parent=0 // pred_fallthru
    _
  %p17 = scmp.eq.s32.totalorder 0, 0
  // Predicated region
  $region14: #{mnn_linear.1} parent=0 // pred_check
    %p18 = pneg %p17
  $region15: #{mnn_linear.1} parent=0 // pred_check_branch
    %20 = sbr.rel (%p18) target = $region17
  $region16: #{mnn_linear.1} parent=0 // pred_region
    %21 = vst [vmem:[%s3] sm:$0xff] 0.0
    %22 = vst [vmem:[%s3 + $0x8] sm:$0xff] 0.0
    %23 = vst [vmem:[%s4] sm:$0xff] 0.0
    %24 = vst [vmem:[%s4 + $0x8] sm:$0xff] 0.0
  $region17: #{mnn_linear.1} parent=0 // pred_fallthru
    _
  %v25 = vld [vmem:[%s0] sm:$0xf]
  %v26 = vld [vmem:[%s0 + $0x4] sm:$0xf]
  %v27 = vld [vmem:[%s2] sm:$0xf]
  %v28 = vld [vmem:[%s2 + $0x4] sm:$0xf]
  %v29 = vld [vmem:[%s2 + $0x8] sm:$0xf]
  %v30 = vld [vmem:[%s2 + $0xc] sm:$0xf]
  %v31 = vld [vmem:[%s2 + $0x10] sm:$0xf]
  %v32 = vld [vmem:[%s2 + $0x14] sm:$0xf]
  %v33 = vld [vmem:[%s2 + $0x18] sm:$0xf]
  %v34 = vld [vmem:[%s2 + $0x1c] sm:$0xf]
  %v35 = vld [vmem:[%s2 + $0x20] sm:$0xf]
  %v36 = vld [vmem:[%s2 + $0x24] sm:$0xf]
  %v37 = vld [vmem:[%s2 + $0x28] sm:$0xf]
  %v38 = vld [vmem:[%s2 + $0x2c] sm:$0xf]
  %v39 = vld [vmem:[%s2 + $0x30] sm:$0xf]
  %v40 = vld [vmem:[%s2 + $0x34] sm:$0xf]
  %v41 = vld [vmem:[%s2 + $0x38] sm:$0xf]
  %v42 = vld [vmem:[%s2 + $0x3c] sm:$0xf]
  %v43 = vld [vmem:[%s1] sm:$0xf]
  %v44 = vld [vmem:[%s1 + $0x4] sm:$0xf]
  %v45 = vunpack.c.l.bf16 %v43
  %v46 = vunpack.c.l.bf16 %v44
  %v47 = vmul.f32 %v45, %v45
  %v48 = vmul.f32 %v46, %v46
  %v49 = vpack.c.bf16 %v48, %v47
  %v50 = vunpack.c.l.bf16 %v27
  %v51 = vunpack.c.l.bf16 %v28
  %v52 = vunpack.c.l.bf16 %v29
  %v53 = vunpack.c.l.bf16 %v30
  %v54 = vunpack.c.l.bf16 %v31
  %v55 = vunpack.c.l.bf16 %v32
  %v56 = vunpack.c.l.bf16 %v33
  %v57 = vunpack.c.l.bf16 %v34
  %v58 = vunpack.c.l.bf16 %v35
  %v59 = vunpack.c.l.bf16 %v36
  %v60 = vunpack.c.l.bf16 %v37
  %v61 = vunpack.c.l.bf16 %v38
  %v62 = vunpack.c.l.bf16 %v39
  %v63 = vunpack.c.l.bf16 %v40
  %v64 = vunpack.c.l.bf16 %v41
  %v65 = vunpack.c.l.bf16 %v42
  %v66 = vmul.f32 %v50, %v50
  %v67 = vmul.f32 %v51, %v51
  %v68 = vmul.f32 %v52, %v52
  %v69 = vmul.f32 %v53, %v53
  %v70 = vmul.f32 %v54, %v54
  %v71 = vmul.f32 %v55, %v55
  %v72 = vmul.f32 %v56, %v56
  %v73 = vmul.f32 %v57, %v57
  %v74 = vmul.f32 %v58, %v58
  %v75 = vmul.f32 %v59, %v59
  %v76 = vmul.f32 %v60, %v60
  %v77 = vmul.f32 %v61, %v61
  %v78 = vmul.f32 %v62, %v62
  %v79 = vmul.f32 %v63, %v63
  %v80 = vmul.f32 %v64, %v64
  %v81 = vmul.f32 %v65, %v65
  %v82 = vpack.c.bf16 %v67, %v66
  %v83 = vpack.c.bf16 %v69, %v68
  %v84 = vpack.c.bf16 %v71, %v70
  %v85 = vpack.c.bf16 %v73, %v72
  %v86 = vpack.c.bf16 %v75, %v74
  %v87 = vpack.c.bf16 %v77, %v76
  %v88 = vpack.c.bf16 %v79, %v78
  %v89 = vpack.c.bf16 %v81, %v80
  %v90 = vld [vmem:[%s3] sm:$0xff]
  %v91 = vld [vmem:[%s3 + $0x8] sm:$0xff]
  %v94 = vunpack.c.l.b16 %v25
  %v95 = vunpack.c.l.b16 %v26
  %v96 = vpack.c.b16 %v95, %v94
  %v114 = vunpack.c.l.b16 %v27
  %v115 = vunpack.c.l.b16 %v28
  %v116 = vunpack.c.l.b16 %v29
  %v117 = vunpack.c.l.b16 %v30
  %v118 = vunpack.c.l.b16 %v31
  %v119 = vunpack.c.l.b16 %v32
  %v120 = vunpack.c.l.b16 %v33
  %v121 = vunpack.c.l.b16 %v34
  %v122 = vunpack.c.l.b16 %v35
  %v123 = vunpack.c.l.b16 %v36
  %v124 = vunpack.c.l.b16 %v37
  %v125 = vunpack.c.l.b16 %v38
  %v126 = vunpack.c.l.b16 %v39
  %v127 = vunpack.c.l.b16 %v40
  %v128 = vunpack.c.l.b16 %v41
  %v129 = vunpack.c.l.b16 %v42
  %v130 = vpack.c.b16 %v115, %v114
  %v131 = vpack.c.b16 %v117, %v116
  %v132 = vpack.c.b16 %v119, %v118
  %v133 = vpack.c.b16 %v121, %v120
  %v134 = vpack.c.b16 %v123, %v122
  %v135 = vpack.c.b16 %v125, %v124
  %v136 = vpack.c.b16 %v127, %v126
  %v137 = vpack.c.b16 %v129, %v128
  %146 = vmatprep.subr.bf16.mxu0 0
  %147 = vmatpush1.bf16.xpose.msra.mxu0 %v130
  %148 = vmatprep.subr.bf16.mxu0 0
  %149 = vmatpush1.bf16.xpose.msra.mxu0 %v131
  %150 = vmatprep.subr.bf16.mxu0 0
  %151 = vmatpush1.bf16.xpose.msra.mxu0 %v132
  %152 = vmatprep.subr.bf16.mxu0 0
  %153 = vmatpush1.bf16.xpose.msra.mxu0 %v133
  %154 = vmatprep.subr.bf16.mxu0 0
  %155 = vmatpush1.bf16.xpose.msra.mxu0 %v134
  %156 = vmatprep.subr.bf16.mxu0 0
  %157 = vmatpush1.bf16.xpose.msra.mxu0 %v135
  %158 = vmatprep.subr.bf16.mxu0 0
  %159 = vmatpush1.bf16.xpose.msra.mxu0 %v136
  %160 = vmatprep.subr.bf16.mxu0 0
  %161 = vmatpush1.bf16.xpose.msra.mxu0 %v137
  %162 = vmatprep.subr.bf16.mxu0 0
  %163 = vmatpush1.bf16.xpose.msra.mxu0 0
  %164 = vmatprep.subr.bf16.mxu0 0
  %165 = vmatpush1.bf16.xpose.msra.mxu0 0
  %166 = vmatprep.subr.bf16.mxu0 0
  %167 = vmatpush1.bf16.xpose.msra.mxu0 0
  %168 = vmatprep.subr.bf16.mxu0 0
  %169 = vmatpush1.bf16.xpose.msra.mxu0 0
  %170 = vmatprep.subr.bf16.mxu0 0
  %171 = vmatpush1.bf16.xpose.msra.mxu0 0
  %172 = vmatprep.subr.bf16.mxu0 0
  %173 = vmatpush1.bf16.xpose.msra.mxu0 0
  %174 = vmatprep.subr.bf16.mxu0 0
  %175 = vmatpush1.bf16.xpose.msra.mxu0 0
  %176 = vmatprep.subr.bf16.mxu0 0
  %177 = vmatpush1.bf16.xpose.msra.mxu0 0
  %178 = vmatprep.mubr.bf16.mxu0 0
  %179 = vmatmul.mubr.bf16.gmra.mrb[0].mxu0 %v96
  %v180 = vpop.f32.mrb[0].mxu0
  %v181 = vadd.f32 0.0, %v180
  %v182 = vpop.f32.mrb[0].mxu0
  %v183 = vpop.f32.mrb[0].mxu0
  %v184 = vadd.f32 0.0, %v183
  %v185 = vpop.f32.mrb[0].mxu0
  %186 = vdwg.mxu0
  %v187 = vadd.f32 %v90, %v181
  %v188 = vadd.f32 %v91, %v184
  %189 = vst [vmem:[%s3] sm:$0xff] %v187
  %190 = vst [vmem:[%s3 + $0x8] sm:$0xff] %v188
  %v191 = vld [vmem:[%s4] sm:$0xff]
  %v192 = vld [vmem:[%s4 + $0x8] sm:$0xff]
  %193 = vmatprep.subr.bf16.mxu0 0
  %194 = vmatpush1.bf16.xpose.msra.mxu0 %v82
  %195 = vmatprep.subr.bf16.mxu0 0
  %196 = vmatpush1.bf16.xpose.msra.mxu0 %v83
  %197 = vmatprep.subr.bf16.mxu0 0
  %198 = vmatpush1.bf16.xpose.msra.mxu0 %v84
  %199 = vmatprep.subr.bf16.mxu0 0
  %200 = vmatpush1.bf16.xpose.msra.mxu0 %v85
  %201 = vmatprep.subr.bf16.mxu0 0
  %202 = vmatpush1.bf16.xpose.msra.mxu0 %v86
  %203 = vmatprep.subr.bf16.mxu0 0
  %204 = vmatpush1.bf16.xpose.msra.mxu0 %v87
  %205 = vmatprep.subr.bf16.mxu0 0
  %206 = vmatpush1.bf16.xpose.msra.mxu0 %v88
  %207 = vmatprep.subr.bf16.mxu0 0
  %208 = vmatpush1.bf16.xpose.msra.mxu0 %v89
  %209 = vmatprep.subr.bf16.mxu0 0
  %210 = vmatpush1.bf16.xpose.msra.mxu0 0
  %211 = vmatprep.subr.bf16.mxu0 0
  %212 = vmatpush1.bf16.xpose.msra.mxu0 0
  %213 = vmatprep.subr.bf16.mxu0 0
  %214 = vmatpush1.bf16.xpose.msra.mxu0 0
  %215 = vmatprep.subr.bf16.mxu0 0
  %216 = vmatpush1.bf16.xpose.msra.mxu0 0
  %217 = vmatprep.subr.bf16.mxu0 0
  %218 = vmatpush1.bf16.xpose.msra.mxu0 0
  %219 = vmatprep.subr.bf16.mxu0 0
  %220 = vmatpush1.bf16.xpose.msra.mxu0 0
  %221 = vmatprep.subr.bf16.mxu0 0
  %222 = vmatpush1.bf16.xpose.msra.mxu0 0
  %223 = vmatprep.subr.bf16.mxu0 0
  %224 = vmatpush1.bf16.xpose.msra.mxu0 0
  %225 = vmatprep.mubr.bf16.mxu0 0
  %226 = vmatmul.mubr.bf16.gmra.mrb[0].mxu0 %v49
  %v227 = vpop.f32.mrb[0].mxu0
  %v228 = vadd.f32 0.0, %v227
  %v229 = vpop.f32.mrb[0].mxu0
  %v230 = vpop.f32.mrb[0].mxu0
  %v231 = vadd.f32 0.0, %v230
  %v232 = vpop.f32.mrb[0].mxu0
  %233 = vdwg.mxu0
  %v234 = vadd.f32 %v191, %v228
  %v235 = vadd.f32 %v192, %v231
  %236 = vst [vmem:[%s4] sm:$0xff] %v234
  %237 = vst [vmem:[%s4 + $0x8] sm:$0xff] %v235
  // Predicated region
  $region18: #{mnn_linear.1} parent=0 // pred_check
    %p238 = pneg %p17
  $region19: #{mnn_linear.1} parent=0 // pred_check_branch
    %240 = sbr.rel (%p238) target = $region21
  $region20: #{mnn_linear.1} parent=0 // pred_region
    %v241 = vld [vmem:[%s3] sm:$0xff]
    %v242 = vld [vmem:[%s3 + $0x8] sm:$0xff]
    %v243 = vmul.f32 %v241, 0.2
    %v244 = vmul.f32 %v242, 0.2
    %245 = vst [vmem:[%s3] sm:$0xff] %v243
    %246 = vst [vmem:[%s3 + $0x8] sm:$0xff] %v244
    %v247 = vld [vmem:[%s4] sm:$0xff]
    %v248 = vld [vmem:[%s4 + $0x8] sm:$0xff]
    %v249 = vmul.f32 %v247, 1.64
    %v250 = vmul.f32 %v248, 1.64
    %v251 = vrsqrt.pop %v249
    %v252 = vmul.f32 %v249, %v251
    %vm253 = vcmp.eq.f32.partialorder %v249, inf
    %v254 = vsel %vm253, %v249, %v252
    %vm255 = vcmp.eq.f32.partialorder %v249, 0.0
    %v256 = vand.u32 %v249, 2147483648
    %v257 = vsel %vm255, %v256, %v254
    %v258 = vrsqrt.pop %v250
    %v259 = vmul.f32 %v250, %v258
    %vm260 = vcmp.eq.f32.partialorder %v250, inf
    %v261 = vsel %vm260, %v250, %v259
    %vm262 = vcmp.eq.f32.partialorder %v250, 0.0
    %v263 = vand.u32 %v250, 2147483648
    %v264 = vsel %vm262, %v263, %v261
    %265 = vst [vmem:[%s4] sm:$0xff] %v257
    %266 = vst [vmem:[%s4 + $0x8] sm:$0xff] %v264
  $region21: #{mnn_linear.1} parent=0 // pred_fallthru
    _
  // Predicated region
  $region22: #{mnn_linear.1} parent=0 // pred_check
    _
  $region23: #{mnn_linear.1} parent=0 // pred_check_branch
    %268 = sbr.rel (0) target = $region25
  $region24: #{mnn_linear.1} parent=0 // pred_region
    _
  $region25: #{mnn_linear.1} parent=0 // pred_fallthru
    _
  // Predicated region
  $region26: #{mnn_linear.1} parent=0 // pred_check
    _
  $region27: #{mnn_linear.1} parent=0 // pred_check_branch
    %270 = sbr.rel (0) target = $region29
  $region28: #{mnn_linear.1} parent=0 // pred_region
    _
  $region29: #{mnn_linear.1} parent=0 // pred_fallthru
    _
  // Predicated region
  $region30: #{mnn_linear.1} parent=0 // pred_check
    _
  $region31: #{mnn_linear.1} parent=0 // pred_check_branch
    %272 = sbr.rel (0) target = $region33
  $region32: #{mnn_linear.1} parent=0 // pred_region
    _
  $region33: #{mnn_linear.1} parent=0 // pred_fallthru
    _
  // Predicated region
  $region34: #{mnn_linear.1} parent=0 // pred_check
    _
  $region35: #{mnn_linear.1} parent=0 // pred_check_branch
    %274 = sbr.rel (0) target = $region37
  $region36: #{mnn_linear.1} parent=0 // pred_region
    _
  $region37: #{mnn_linear.1} parent=0 // pred_fallthru
    _

</llo_original>
